<compile_context>
chip_gen: v6e
topology: v6e:2x2x1
jax: 0.10.0
libtpu: 0.0.40
codegen_flags: <defaults>
</compile_context>

<pallas_src>
import functools

import jax
import jax.numpy as jnp
from jax.experimental import pallas as pl
from jax.experimental.pallas import tpu as pltpu


def tv_loss_kernel(x_ref, out_ref):
    """Per-sample total-variation partial sum.

    x_ref:   (1, C, H, W) block — one full sample resident in VMEM.
    out_ref: (1, 1, 1) f32 slot holding this sample's partial sum.
    """
    x = x_ref[0].astype(jnp.float32)          # (C, H, W)

    # Width (horizontal) first differences, squared.
    dw = x[:, :, 1:] - x[:, :, :-1]           # (C, H, W-1)
    # Height (vertical) first differences, squared.
    dh = x[:, 1:, :] - x[:, :-1, :]           # (C, H-1, W)

    psum = jnp.sum(dw * dw) + jnp.sum(dh * dh)
    out_ref[...] = jnp.full(out_ref.shape, psum, jnp.float32)


@functools.partial(jax.jit, static_argnames=("weight",))
def tv_loss(x, weight=1.0):
    """Pallas TVLoss forward.  x: (N, C, H, W); returns a scalar."""
    N, C, H, W = x.shape
    partials = pl.pallas_call(
        tv_loss_kernel,
        out_shape=jax.ShapeDtypeStruct((N, 1, 1), jnp.float32),
        grid=(N,),
        in_specs=[pl.BlockSpec((1, C, H, W), lambda n: (n, 0, 0, 0))],
        out_specs=pl.BlockSpec((1, 1, 1), lambda n: (n, 0, 0)),
        compiler_params=pltpu.CompilerParams(
            dimension_semantics=("parallel",)),
    )(x)
    return weight * jnp.sum(partials)


def tv_loss_reference(x, weight=1.0):
    """Pure-JAX reference matching the PyTorch TVLoss module exactly."""
    x = x.astype(jnp.float32)
    w_variance = jnp.sum((x[:, :, :, :-1] - x[:, :, :, 1:]) ** 2)
    h_variance = jnp.sum((x[:, :, :-1, :] - x[:, :, 1:, :]) ** 2)
    return weight * (h_variance + w_variance)


if __name__ == "__main__":
    key = jax.random.PRNGKey(0)

    N, C, H, W = 2, 4, 16, 16
    x = jax.random.normal(key, (N, C, H, W), jnp.float32)

    loss = tv_loss(x, weight=1.0)
    loss = jax.block_until_ready(loss)

    ref = tv_loss_reference(x, weight=1.0)
    assert loss.shape == ()
    assert jnp.allclose(loss, ref, atol=1e-3, rtol=1e-4), (
        float(loss), float(ref))

    print("KERNEL_OK")
</pallas_src>

<mosaic_0001>
module attributes {stable_mosaic.version = 11 : i64} {
  func.func @tv_loss_kernel(%arg0: i32, %arg1: memref<1x4x16x16xf32, #tpu.memory_space<vmem>>, %arg2: memref<1x1x1xf32, #tpu.memory_space<vmem>>) attributes {dimension_semantics = [#tpu.dimension_semantics<parallel>], iteration_bounds = array<i64: 2>, scalar_prefetch = 0 : i64, scratch_operands = 0 : i64, tpu.core_type = #tpu.core_type<tc>, window_params = [{transform_indices = @transform_0, window_bounds = array<i64: 1, 4, 16, 16>}, {transform_indices = @transform_1, window_bounds = array<i64: 1, 1, 1>}]} {
    %c0 = arith.constant 0 : index
    %c0_0 = arith.constant 0 : index
    %c0_1 = arith.constant 0 : index
    %c0_2 = arith.constant 0 : index
    %0 = vector.load %arg1[%c0, %c0_0, %c0_1, %c0_2] : memref<1x4x16x16xf32, #tpu.memory_space<vmem>>, vector<1x4x16x16xf32>
    %1 = vector.shape_cast %0 : vector<1x4x16x16xf32> to vector<4x16x16xf32>
    %2 = vector.extract_strided_slice %1 {offsets = [0, 0, 1], sizes = [4, 16, 15], strides = [1, 1, 1]} : vector<4x16x16xf32> to vector<4x16x15xf32>
    %3 = vector.extract_strided_slice %1 {offsets = [0, 0, 0], sizes = [4, 16, 15], strides = [1, 1, 1]} : vector<4x16x16xf32> to vector<4x16x15xf32>
    %4 = arith.subf %2, %3 : vector<4x16x15xf32>
    %5 = vector.extract_strided_slice %1 {offsets = [0, 1, 0], sizes = [4, 15, 16], strides = [1, 1, 1]} : vector<4x16x16xf32> to vector<4x15x16xf32>
    %6 = vector.extract_strided_slice %1 {offsets = [0, 0, 0], sizes = [4, 15, 16], strides = [1, 1, 1]} : vector<4x16x16xf32> to vector<4x15x16xf32>
    %7 = arith.subf %5, %6 : vector<4x15x16xf32>
    %8 = arith.mulf %4, %4 : vector<4x16x15xf32>
    %9 = vector.shape_cast %8 : vector<4x16x15xf32> to vector<1x4x16x15xf32>
    %cst = arith.constant dense<0.000000e+00> : vector<1xf32>
    %10 = vector.multi_reduction <add>, %9, %cst [1, 2, 3] : vector<1x4x16x15xf32> to vector<1xf32>
    %11 = vector.shape_cast %10 : vector<1xf32> to vector<1x1x1x1xf32>
    %12 = vector.extract %11[0, 0, 0, 0] : f32 from vector<1x1x1x1xf32>
    %13 = arith.mulf %7, %7 : vector<4x15x16xf32>
    %14 = vector.shape_cast %13 : vector<4x15x16xf32> to vector<1x4x15x16xf32>
    %cst_3 = arith.constant dense<0.000000e+00> : vector<1xf32>
    %15 = vector.multi_reduction <add>, %14, %cst_3 [1, 2, 3] : vector<1x4x15x16xf32> to vector<1xf32>
    %16 = vector.shape_cast %15 : vector<1xf32> to vector<1x1x1x1xf32>
    %17 = vector.extract %16[0, 0, 0, 0] : f32 from vector<1x1x1x1xf32>
    %18 = arith.addf %12, %17 : f32
    %19 = vector.broadcast %18 : f32 to vector<1x1x1xf32>
    %c0_4 = arith.constant 0 : index
    %c0_5 = arith.constant 0 : index
    %c0_6 = arith.constant 0 : index
    %20 = vector.load %arg2[%c0_4, %c0_5, %c0_6] : memref<1x1x1xf32, #tpu.memory_space<vmem>>, vector<1x1x1xf32>
    tpu.vector_store %arg2[%c0_4, %c0_5, %c0_6], %19 {strides = array<i32>} : memref<1x1x1xf32, #tpu.memory_space<vmem>>, vector<1x1x1xf32>,
    return
  }
  func.func @transform_0(%arg0: i32) -> (i32, i32, i32, i32) {
    %c0_i32 = arith.constant 0 : i32
    %c0_i32_0 = arith.constant 0 : i32
    %c0_i32_1 = arith.constant 0 : i32
    %c0_i32_2 = arith.constant 0 : i32
    return %arg0, %c0_i32, %c0_i32_0, %c0_i32_1 : i32, i32, i32, i32
  }
  func.func @transform_1(%arg0: i32) -> (i32, i32, i32) {
    %c0_i32 = arith.constant 0 : i32
    %c0_i32_0 = arith.constant 0 : i32
    %c0_i32_1 = arith.constant 0 : i32
    return %arg0, %c0_i32, %c0_i32_0 : i32, i32, i32
  }
}

</mosaic_0001>

<llo_original>
// kernel: tv_loss.1
$region0: #{tv_loss.1}
  #allocation0 [shape = 'u32[]', space=smem, size = 0x4, offset = 0x4, fixed_abs, tag = 'smem constant byte address 0x4 - core index']
  #allocation1 [shape = 'u32[144,128]{1,0:T(1,128)}', space=vmem, size = 0x12000, scoped, tag = 'internal scratch']
  %s0 = inlined_call_operand.hbm [shape: f32[2,4,16,16], index: 0, kind: input, shape index: {}]
  %s1 = inlined_call_operand.vmem [shape: f32[2,1,1], index: 1, kind: output, shape index: {}]
  %s2 = sld [smem:[#allocation0]]
  $region41: #{tv_loss.1} parent=0
    _
  %s4 = ssub.s32 1, %s2
  %s5 = scalar_select 0, %s4, %s2
  $region1: #{tv_loss.1} parent=0
    #allocation2 [shape = 'u8[65536]{0}', space=vmem, size = 0x10000, scoped, tag = 'input window, operand 0']
    #allocation3 [shape = 's32[2]{0}', space=sflag, size = 0x8, scoped, tag = 'scoped memory for tv_loss.1']
    %6 = vsyncpa [#allocation3], 0
    %s7 = scalar_lea.sflag [#allocation3], 1
    %8 = vsyncpa %s7, 0
    loop: start=0, step=1, limit=4
    $region2: #{tv_loss.1} parent=1 // loop_pre_header
      _
    $region3: #{tv_loss.1} parent=1 // loop_header
      %s10 = sphi 0, %s14
      %p11 = scmp.ge.s32.totalorder %s10, 4
      %s20 = sphi 0, %s22
      %s23 = sphi 0, %s20
      %s24 = sphi 0, %s23
      %s40 = sphi 0, %s24
      %s46 = sphi 0, %s48
      %s49 = sphi 0, %s46
      %s50 = sphi 0, %s49
      %s66 = sphi 0, %s50
    $region4: #{tv_loss.1} parent=1 // loop_header_branch
      %13 = sbr.rel (%p11) target = $region8
    $region5: #{tv_loss.1} parent=1 // loop_body
      %s15 = ssub.s32 %s10, 1
      %s16 = ssub.s32 %s10, 2
      %s17 = sadd.s32 %s10, 1
      %s18 = ssub.s32 %s10, %s17
      %p19 = scmp.eq.s32.totalorder %s18, 0
      %s21 = sadd.s32 %s20, 1
      %s22 = scalar_select %p19, %s20, %s21
      %p25 = pneg %p19
      %p26 = scmp.eq.s32.totalorder %s10, 1
      %p27 = por %p25, %p26
      %p28 = scmp.ne.s32.totalorder %s20, %s23
      %p29 = scmp.eq.s32.totalorder %s10, 0
      %p30 = por %p28, %p29
      %p31 = scmp.ne.s32.totalorder %s20, %s23
      %p32 = scmp.eq.s32.totalorder %s15, 1
      %p33 = por %p31, %p32
      %p34 = scmp.ne.s32.totalorder %s23, %s24
      %p35 = scmp.eq.s32.totalorder %s15, 0
      %p36 = por %p34, %p35
      %p37 = scmp.ne.s32.totalorder %s23, %s24
      %p38 = scmp.eq.s32.totalorder %s16, 1
      %p39 = por %p37, %p38
      %p41 = scmp.ne.s32.totalorder %s24, %s40
      %p42 = scmp.eq.s32.totalorder %s16, 0
      %p43 = por %p41, %p42
      %s44 = ssub.s32 %s10, %s17
      %p45 = scmp.eq.s32.totalorder %s44, 0
      %s47 = sadd.s32 %s46, 1
      %s48 = scalar_select %p45, %s46, %s47
      %p51 = pneg %p45
      %p52 = scmp.eq.s32.totalorder %s10, 1
      %p53 = por %p51, %p52
      %p54 = scmp.ne.s32.totalorder %s46, %s49
      %p55 = scmp.eq.s32.totalorder %s10, 0
      %p56 = por %p54, %p55
      %p57 = scmp.ne.s32.totalorder %s46, %s49
      %p58 = scmp.eq.s32.totalorder %s15, 1
      %p59 = por %p57, %p58
      %p60 = scmp.ne.s32.totalorder %s49, %s50
      %p61 = scmp.eq.s32.totalorder %s15, 0
      %p62 = por %p60, %p61
      %p63 = scmp.ne.s32.totalorder %s49, %s50
      %p64 = scmp.eq.s32.totalorder %s16, 1
      %p65 = por %p63, %p64
      %p67 = scmp.ne.s32.totalorder %s50, %s66
      %p68 = scmp.eq.s32.totalorder %s16, 0
      %p69 = por %p67, %p68
      %p70 = scmp.le.s32.totalorder 1, %s10
      %p71 = scmp.lt.s32.totalorder %s10, 3
      %p72 = pnand %p70, %p71
      %p73 = pneg %p72
      // Predicated region
      $region9: #{tv_loss.1} parent=5 // pred_check
        _
      $region10: #{tv_loss.1} parent=5 // pred_check_branch
        %75 = sbr.rel (%p72) target = $region12
      $region11: #{tv_loss.1} parent=5 // pred_region
        %s76 = ssub.s32 %s10, 1
      $region12: #{tv_loss.1} parent=5 // pred_fallthru
        _
      %p77 = scmp.lt.s32.totalorder %s10, 2
      // Predicated region
      $region13: #{tv_loss.1} parent=5 // pred_check
        %p78 = pneg %p77
      $region14: #{tv_loss.1} parent=5 // pred_check_branch
        %80 = sbr.rel (%p78) target = $region16
      $region15: #{tv_loss.1} parent=5 // pred_region
        // Predicated region
        $region17: #{tv_loss.1} parent=15 // pred_check
          %p81 = pneg %p30
        $region18: #{tv_loss.1} parent=15 // pred_check_branch
          %83 = sbr.rel (%p81) target = $region20
        $region19: #{tv_loss.1} parent=15 // pred_region
          %s84 = sand.u32 %s20, 1
          %s85 = scalar_lea.sflag [#allocation3], %s84
          %s86 = sand.u32 %s20, 1
          %s87 = smul.addr %s86, 64
          %s88 = scalar_lea.vmem [#allocation2], %s87
          %s90 = ssub.s32 1024, 1024
          %91 = vsyncadd %s85, %s90
          %s92 = smul.addr %s10, 8
          %s93 = smul.addr %s92, 128
          %s94 = scalar_lea.hbm %s0, %s93
          %s95 = sshll.u32 %s88, 4
          %s96 = int_to_ptr.vmem [resolvable:$true] %s95
          %101 = dma.hbm_to_vmem [thread:$0]  %s94, 1024, %s96, %s85, 128, 128, 8
        $region20: #{tv_loss.1} parent=15 // pred_fallthru
          _
      $region16: #{tv_loss.1} parent=5 // pred_fallthru
        _
      %p102 = scmp.le.s32.totalorder 1, %s10
      %p103 = scmp.lt.s32.totalorder %s10, 3
      %p104 = pnand %p102, %p103
      %p105 = pneg %p104
      // Predicated region
      $region21: #{tv_loss.1} parent=5 // pred_check
        _
      $region22: #{tv_loss.1} parent=5 // pred_check_branch
        %107 = sbr.rel (%p104) target = $region24
      $region23: #{tv_loss.1} parent=5 // pred_region
        %s108 = ssub.s32 %s10, 1
        %s109 = sand.u32 %s23, 1
        %s110 = scalar_lea.sflag [#allocation3], %s109
        %s111 = sand.u32 %s23, 1
        %s112 = smul.addr %s111, 64
        %s113 = scalar_lea.vmem [#allocation2], %s112
        // Predicated region
        $region25: #{tv_loss.1} parent=23 // pred_check
          %p114 = pneg %p36
        $region26: #{tv_loss.1} parent=23 // pred_check_branch
          %116 = sbr.rel (%p114) target = $region28
        $region27: #{tv_loss.1} parent=23 // pred_region
          %117 = dma.done %s110, 1024
        $region28: #{tv_loss.1} parent=23 // pred_fallthru
          _
        %s118 = sand.u32 %s23, 1
        %s119 = scalar_lea.sflag [#allocation3], %s118
        %s120 = sand.u32 %s23, 1
        %s121 = smul.addr %s120, 64
        %s122 = scalar_lea.vmem [#allocation2], %s121
        %p123 = pneg %p36
        %p124 = pneg %p33
        %p125 = pneg %p62
        %p126 = pneg %p59
        %p127 = scmp.lt.s32.totalorder %s15, 1
        %s128 = scalar_select %p127, %s15, 1
        %s129 = scalar_lea.vmem %s1, %s128
        %p130 = scmp.lt.s32.totalorder %s15, 1
        %s131 = scalar_select %p130, %s15, 1
        %s132 = scalar_lea.vmem %s1, %s131
        %v133 = vld [vmem:[%s113] sm:$0xff]
        %v134 = vld [vmem:[%s113 + $0x8] sm:$0xff]
        %v135 = vld [vmem:[%s113 + $0x10] sm:$0xff]
        %v136 = vld [vmem:[%s113 + $0x18] sm:$0xff]
        %v137 = vld [vmem:[%s113 + $0x20] sm:$0xff]
        %v138 = vld [vmem:[%s113 + $0x28] sm:$0xff]
        %v139 = vld [vmem:[%s113 + $0x30] sm:$0xff]
        %v140 = vld [vmem:[%s113 + $0x38] sm:$0xff]
        %149 = vrot.lane.b32.xlu0 %v133, 1
        %v150 = vpop.permute.xlu0 %149
        %151 = vrot.lane.b32.xlu0 %v134, 1
        %v152 = vpop.permute.xlu0 %151
        %153 = vrot.lane.b32.xlu0 %v135, 1
        %v154 = vpop.permute.xlu0 %153
        %155 = vrot.lane.b32.xlu0 %v136, 1
        %v156 = vpop.permute.xlu0 %155
        %157 = vrot.lane.b32.xlu0 %v137, 1
        %v158 = vpop.permute.xlu0 %157
        %159 = vrot.lane.b32.xlu0 %v138, 1
        %v160 = vpop.permute.xlu0 %159
        %161 = vrot.lane.b32.xlu0 %v139, 1
        %v162 = vpop.permute.xlu0 %161
        %163 = vrot.lane.b32.xlu0 %v140, 1
        %v164 = vpop.permute.xlu0 %163
        %v173 = vsub.f32 %v133, %v150
        %v174 = vsub.f32 %v134, %v152
        %v175 = vsub.f32 %v135, %v154
        %v176 = vsub.f32 %v136, %v156
        %v177 = vsub.f32 %v137, %v158
        %v178 = vsub.f32 %v138, %v160
        %v179 = vsub.f32 %v139, %v162
        %v180 = vsub.f32 %v140, %v164
        %vm181 = vcmask 1040384
        %v182 = vrot.slane %v133, 7
        %v183 = vrot.slane %v134, 7
        %v184 = vsel %vm181, %v182, %v183
        %v185 = vrot.slane %v135, 7
        %v186 = vrot.slane %v136, 7
        %v187 = vsel %vm181, %v185, %v186
        %v188 = vrot.slane %v137, 7
        %v189 = vrot.slane %v138, 7
        %v190 = vsel %vm181, %v188, %v189
        %v191 = vrot.slane %v139, 7
        %v192 = vrot.slane %v140, 7
        %v193 = vsel %vm181, %v191, %v192
        %v202 = vsub.f32 %v133, %v182
        %v203 = vsub.f32 %v134, %v184
        %v204 = vsub.f32 %v135, %v185
        %v205 = vsub.f32 %v136, %v187
        %v206 = vsub.f32 %v137, %v188
        %v207 = vsub.f32 %v138, %v190
        %v208 = vsub.f32 %v139, %v191
        %v209 = vsub.f32 %v140, %v193
        %v210 = vmul.f32 %v173, %v173
        %v211 = vmul.f32 %v174, %v174
        %v212 = vmul.f32 %v175, %v175
        %v213 = vmul.f32 %v176, %v176
        %v214 = vmul.f32 %v177, %v177
        %v215 = vmul.f32 %v178, %v178
        %v216 = vmul.f32 %v179, %v179
        %v217 = vmul.f32 %v180, %v180
        %226 = vrot.lane.b32.xlu0 %v210, 127
        %v227 = vpop.permute.xlu0 %226
        %228 = vrot.lane.b32.xlu0 %v211, 127
        %v229 = vpop.permute.xlu0 %228
        %230 = vrot.lane.b32.xlu0 %v212, 127
        %v231 = vpop.permute.xlu0 %230
        %232 = vrot.lane.b32.xlu0 %v213, 127
        %v233 = vpop.permute.xlu0 %232
        %234 = vrot.lane.b32.xlu0 %v214, 127
        %v235 = vpop.permute.xlu0 %234
        %236 = vrot.lane.b32.xlu0 %v215, 127
        %v237 = vpop.permute.xlu0 %236
        %238 = vrot.lane.b32.xlu0 %v216, 127
        %v239 = vpop.permute.xlu0 %238
        %240 = vrot.lane.b32.xlu0 %v217, 127
        %v241 = vpop.permute.xlu0 %240
        %vm250 = vcmask 121856
        %v251 = vsel %vm250, %v227, 0.0
        %v252 = vsel %vm250, %v229, 0.0
        %v253 = vadd.f32 %v251, %v252
        %v254 = vsel %vm250, %v231, 0.0
        %v255 = vadd.f32 %v253, %v254
        %v256 = vsel %vm250, %v233, 0.0
        %v257 = vadd.f32 %v255, %v256
        %v258 = vsel %vm250, %v235, 0.0
        %v259 = vadd.f32 %v257, %v258
        %v260 = vsel %vm250, %v237, 0.0
        %v261 = vadd.f32 %v259, %v260
        %v262 = vsel %vm250, %v239, 0.0
        %v263 = vadd.f32 %v261, %v262
        %v264 = vsel %vm250, %v241, 0.0
        %v265 = vadd.f32 %v263, %v264
        %266 = vadd.xlane.f32.xlu0 %v265
        %v267 = vpop.xlane.xlu0 %266
        %v268 = vrot.slane %v267, 4
        %v269 = vadd.f32 %v267, %v268
        %v270 = vrot.slane %v269, 2
        %v271 = vadd.f32 %v269, %v270
        %v272 = vrot.slane %v271, 1
        %v273 = vadd.f32 %v271, %v272
        %s274 = vtos %v273
        %v275 = vmul.f32 %v202, %v202
        %v276 = vmul.f32 %v203, %v203
        %v277 = vmul.f32 %v204, %v204
        %v278 = vmul.f32 %v205, %v205
        %v279 = vmul.f32 %v206, %v206
        %v280 = vmul.f32 %v207, %v207
        %v281 = vmul.f32 %v208, %v208
        %v282 = vmul.f32 %v209, %v209
        %vm291 = vcmask 1046528
        %v292 = vrot.slane %v275, 1
        %v293 = vrot.slane %v276, 1
        %v294 = vsel %vm291, %v292, %v293
        %v295 = vrot.slane %v277, 1
        %v296 = vrot.slane %v278, 1
        %v297 = vsel %vm291, %v295, %v296
        %v298 = vrot.slane %v279, 1
        %v299 = vrot.slane %v280, 1
        %v300 = vsel %vm291, %v298, %v299
        %v301 = vrot.slane %v281, 1
        %v302 = vrot.slane %v282, 1
        %v303 = vsel %vm291, %v301, %v302
        %vm312 = vcmask 130048
        %v313 = vsel %vm312, %v294, 0.0
        %vm314 = vcmask 129024
        %v315 = vsel %vm314, %v293, 0.0
        %v316 = vadd.f32 %v313, %v315
        %v317 = vsel %vm312, %v297, 0.0
        %v318 = vadd.f32 %v316, %v317
        %v319 = vsel %vm314, %v296, 0.0
        %v320 = vadd.f32 %v318, %v319
        %v321 = vsel %vm312, %v300, 0.0
        %v322 = vadd.f32 %v320, %v321
        %v323 = vsel %vm314, %v299, 0.0
        %v324 = vadd.f32 %v322, %v323
        %v325 = vsel %vm312, %v303, 0.0
        %v326 = vadd.f32 %v324, %v325
        %v327 = vsel %vm314, %v302, 0.0
        %v328 = vadd.f32 %v326, %v327
        %329 = vadd.xlane.f32.xlu0 %v328
        %v330 = vpop.xlane.xlu0 %329
        %v331 = vrot.slane %v330, 4
        %v332 = vadd.f32 %v330, %v331
        %v333 = vrot.slane %v332, 2
        %v334 = vadd.f32 %v332, %v333
        %v335 = vrot.slane %v334, 1
        %v336 = vadd.f32 %v334, %v335
        %s337 = vtos %v336
        %s338 = sadd.f32 %s274, %s337
        %v339 = vstv %s338
        %vm340 = vcmask 0
        %341 = vst.msk [vmem:[%s132] sm:$0x1] %vm340, %v339
        %p342 = scmp.lt.s32.totalorder %s15, 1
        %s343 = scalar_select %p342, %s15, 1
        %s344 = scalar_lea.vmem %s1, %s343
        // Predicated region
        $region29: #{tv_loss.1} parent=23 // pred_check
          %p345 = pneg %p59
        $region30: #{tv_loss.1} parent=23 // pred_check_branch
          %347 = sbr.rel (%p345) target = $region32
        $region31: #{tv_loss.1} parent=23 // pred_region
          _
        $region32: #{tv_loss.1} parent=23 // pred_fallthru
          _
      $region24: #{tv_loss.1} parent=5 // pred_fallthru
        _
      %p348 = scmp.le.s32.totalorder 2, %s10
      // Predicated region
      $region33: #{tv_loss.1} parent=5 // pred_check
        %p349 = pneg %p348
      $region34: #{tv_loss.1} parent=5 // pred_check_branch
        %351 = sbr.rel (%p349) target = $region36
      $region35: #{tv_loss.1} parent=5 // pred_region
        %s352 = ssub.s32 %s10, 2
        // Predicated region
        $region37: #{tv_loss.1} parent=35 // pred_check
          %p353 = pneg %p65
        $region38: #{tv_loss.1} parent=35 // pred_check_branch
          %355 = sbr.rel (%p353) target = $region40
        $region39: #{tv_loss.1} parent=35 // pred_region
          %p356 = scmp.lt.s32.totalorder %s16, 1
          %s357 = scalar_select %p356, %s16, 1
          %s358 = scalar_lea.vmem %s1, %s357
        $region40: #{tv_loss.1} parent=35 // pred_fallthru
          _
      $region36: #{tv_loss.1} parent=5 // pred_fallthru
        _
    $region6: #{tv_loss.1} parent=1 // loop_footer
      %s14 = sadd.s32 1, %s10
    $region7: #{tv_loss.1} parent=1 // loop_footer_branch
      %9 = sbr.rel target = $region3
    $region8: #{tv_loss.1} parent=1 // loop_exit
      _
    %359 = vsyncpa [#allocation3], 1
    %s360 = scalar_lea.sflag [#allocation3], 1
    %361 = vsyncpa %s360, 1

</llo_original>
